<compile_context>
chip_gen: v5e
topology: v5e:2x2
jax: 0.10.0
libtpu: 0.0.40
codegen_flags: <defaults>
</compile_context>

<pallas_src>
import functools

import jax
import jax.numpy as jnp
from jax import lax
from jax.experimental import pallas as pl
from jax.experimental.pallas import tpu as pltpu

_SUBLANE = 8


def _round_up(n, m):
    return ((n + m - 1) // m) * m


def _vmem_budget():
    """(vmem_limit_bytes, tile_budget_bytes) — generation-aware with a safe fallback."""
    try:
        cap = int(pltpu.get_tpu_info().vmem_capacity_bytes)
    except Exception:
        cap = 0
    if cap <= 0:
        cap = 64 << 20  # conservative: v7x per-TC physical VMEM
    limit = min(cap * 3 // 4, 100 << 20)   # ~48 MiB on v7x, ~96 MiB on v5e/v6e
    return limit, limit // 2


def _choose_tile(rows, budget_bytes, per_row_bytes, max_rows=4096):
    """Largest multiple-of-8 row tile fitting the budget, with >= 2 grid steps."""
    t = max(budget_bytes // max(per_row_bytes, 1), _SUBLANE)
    t = min(int(t), max_rows)
    if rows > _SUBLANE:
        # Ensure at least 2 grid steps so both v7x TensorCores get work.
        t = min(t, _round_up(pl.cdiv(rows, 2), _SUBLANE))
    t = min(t, _round_up(rows, _SUBLANE))
    return max((int(t) // _SUBLANE) * _SUBLANE, _SUBLANE)


def _dropout_scale_mask(seed, dropout_p, rows, d, dtype):
    """Inverted-dropout scale mask over the full logical (rows, d) shape.

    Derived from absolute indices, so it is identical regardless of tile size,
    feature padding, or TPU generation.
    """
    keep = jax.random.bernoulli(jax.random.PRNGKey(seed), 1.0 - dropout_p, (rows, d))
    return keep.astype(dtype) * jnp.asarray(1.0 / (1.0 - dropout_p), dtype)


def _layernorm_store(z, gamma, beta, o_ref, eps):
    """o = LayerNorm(z) * gamma + beta; single-pass stats in f32."""
    inv_d = jnp.float32(1.0 / z.shape[-1])
    mean = jnp.sum(z, axis=-1, keepdims=True) * inv_d
    mean_sq = jnp.sum(z * z, axis=-1, keepdims=True) * inv_d
    var = jnp.maximum(mean_sq - mean * mean, 0.0)
    inv = lax.rsqrt(var + jnp.float32(eps))
    o_ref[...] = ((z - mean) * inv * gamma + beta).astype(o_ref.dtype)


def _addnorm_kernel(*refs, eps, use_mask):
    if use_mask:
        x_ref, y_ref, m_ref, g_ref, b_ref, o_ref = refs
    else:
        x_ref, y_ref, g_ref, b_ref, o_ref = refs
    y = y_ref[...].astype(jnp.float32)
    if use_mask:
        y = y * m_ref[...].astype(jnp.float32)          # inverted dropout
    z = x_ref[...].astype(jnp.float32) + y               # residual add
    _layernorm_store(z, g_ref[...].astype(jnp.float32),
                     b_ref[...].astype(jnp.float32), o_ref, eps)


def _addnorm_linear_kernel(*refs, eps, use_mask):
    if use_mask:
        x_ref, w_ref, b_ref, m_ref, g_ref, be_ref, o_ref = refs
    else:
        x_ref, w_ref, b_ref, g_ref, be_ref, o_ref = refs
    x = x_ref[...]
    # Fused sublayer: Linear(x) on the MXU in the input dtype (bf16-native on
    # v6e/v7x), accumulating in f32.  Never hits HBM.
    y = jnp.dot(x, w_ref[...], preferred_element_type=jnp.float32)
    y = y + b_ref[...].astype(jnp.float32)
    if use_mask:
        y = y * m_ref[...].astype(jnp.float32)           # inverted dropout
    z = x.astype(jnp.float32) + y                        # residual add
    _layernorm_store(z, g_ref[...].astype(jnp.float32),
                     be_ref[...].astype(jnp.float32), o_ref, eps)


def add_norm(x, sublayer_out, gamma, beta, *, dropout_p=0.1, training=False,
             eps=1e-5, seed=0, tile_rows=None):
    """LayerNorm(x + Dropout(sublayer_out)) along the last axis (general path)."""
    assert x.shape == sublayer_out.shape
    orig_shape = x.shape
    d = orig_shape[-1]
    x2 = x.reshape(-1, d)
    y2 = sublayer_out.reshape(-1, d)
    rows = x2.shape[0]
    use_mask = bool(training) and float(dropout_p) > 0.0

    vmem_limit, budget = _vmem_budget()
    n_streams = 3 + (1 if use_mask else 0)               # x, y, out (+ mask)
    per_row = d * (2 * n_streams * x.dtype.itemsize + 4 * 4)
    tile = int(tile_rows) if tile_rows is not None else _choose_tile(rows, budget, per_row)
    tile = max((min(tile, _round_up(rows, _SUBLANE)) // _SUBLANE) * _SUBLANE, _SUBLANE)

    row_spec = pl.BlockSpec((tile, d), lambda i: (i, 0))
    vec_spec = pl.BlockSpec((1, d), lambda i: (0, 0))     # resident params

    inputs = [x2, y2]
    in_specs = [row_spec, row_spec]
    if use_mask:
        inputs.append(_dropout_scale_mask(seed, float(dropout_p), rows, d, x.dtype))
        in_specs.append(row_spec)
    inputs += [gamma.reshape(1, d), beta.reshape(1, d)]
    in_specs += [vec_spec, vec_spec]

    out = pl.pallas_call(
        functools.partial(_addnorm_kernel, eps=float(eps), use_mask=use_mask),
        out_shape=jax.ShapeDtypeStruct((rows, d), x.dtype),
        grid=(pl.cdiv(rows, tile),),          # partial last block, no padding copies
        in_specs=in_specs,
        out_specs=row_spec,
        compiler_params=pltpu.CompilerParams(
            dimension_semantics=("parallel",),
            vmem_limit_bytes=vmem_limit),
    )(*inputs)
    return out.reshape(orig_shape)


def add_norm_linear(x, w, b, gamma, beta, *, dropout_p=0.1, training=False,
                    eps=1e-5, seed=0, tile_rows=None):
    """LayerNorm(x + Dropout(x @ w + b)) with the Linear fused into the kernel."""
    orig_shape = x.shape
    d = orig_shape[-1]
    assert w.shape == (d, d)
    x2 = x.reshape(-1, d)
    rows = x2.shape[0]
    use_mask = bool(training) and float(dropout_p) > 0.0

    vmem_limit, budget = _vmem_budget()
    budget = max(budget - 2 * d * d * w.dtype.itemsize, 1 << 20)  # resident weight
    n_streams = 2 + (1 if use_mask else 0)                # x, out (+ mask)
    per_row = d * (2 * n_streams * x.dtype.itemsize + 4 * 4)
    tile = int(tile_rows) if tile_rows is not None else _choose_tile(rows, budget, per_row)
    tile = max((min(tile, _round_up(rows, _SUBLANE)) // _SUBLANE) * _SUBLANE, _SUBLANE)

    row_spec = pl.BlockSpec((tile, d), lambda i: (i, 0))
    vec_spec = pl.BlockSpec((1, d), lambda i: (0, 0))     # resident params

    inputs = [x2, w, b.reshape(1, d)]
    in_specs = [row_spec,
                pl.BlockSpec((d, d), lambda i: (0, 0)),   # weight resident
                vec_spec]
    if use_mask:
        inputs.append(_dropout_scale_mask(seed, float(dropout_p), rows, d, x.dtype))
        in_specs.append(row_spec)
    inputs += [gamma.reshape(1, d), beta.reshape(1, d)]
    in_specs += [vec_spec, vec_spec]

    out = pl.pallas_call(
        functools.partial(_addnorm_linear_kernel, eps=float(eps), use_mask=use_mask),
        out_shape=jax.ShapeDtypeStruct((rows, d), x.dtype),
        grid=(pl.cdiv(rows, tile),),
        in_specs=in_specs,
        out_specs=row_spec,
        compiler_params=pltpu.CompilerParams(
            dimension_semantics=("parallel",),
            vmem_limit_bytes=vmem_limit),
    )(*inputs)
    return out.reshape(orig_shape)


if __name__ == "__main__":
    key = jax.random.PRNGKey(0)
    batch, seq, input_dim = 2, 8, 32

    kx, kw, kb = jax.random.split(key, 3)
    x = jax.random.normal(kx, (batch, seq, input_dim), dtype=jnp.float32)

    # Deterministic "sublayer": Linear(input_dim -> input_dim), fused in-kernel.
    w = jax.random.normal(kw, (input_dim, input_dim), dtype=jnp.float32) * 0.05
    b = jax.random.normal(kb, (input_dim,), dtype=jnp.float32) * 0.01

    # LayerNorm parameters (PyTorch default init: weight=1, bias=0).
    gamma = jnp.ones((input_dim,), dtype=jnp.float32)
    beta = jnp.zeros((input_dim,), dtype=jnp.float32)

    def ln_ref(z, g, be, eps=1e-5):
        m = jnp.mean(z, axis=-1, keepdims=True)
        v = jnp.mean((z - m) ** 2, axis=-1, keepdims=True)
        return (z - m) / jnp.sqrt(v + eps) * g + be

    # --- Fused Linear sublayer, eval mode (dropout is identity) ------------
    out = jax.block_until_ready(
        add_norm_linear(x, w, b, gamma, beta, dropout_p=0.1, training=False))
    ref = ln_ref(x + (x @ w + b), gamma, beta)
    assert jnp.allclose(out, ref, atol=1e-4, rtol=1e-4), "fused AddNorm mismatch"

    # --- General path (arbitrary sublayer output), lane-dense D=128 --------
    d2 = 128
    x2 = jax.random.normal(jax.random.PRNGKey(1), (4, 8, d2), dtype=jnp.float32)
    sub = jnp.tanh(x2) * 0.5       # stand-in for an arbitrary sublayer(X)
    g2 = jnp.ones((d2,), jnp.float32)
    b2 = jnp.zeros((d2,), jnp.float32)
    out2 = jax.block_until_ready(
        add_norm(x2, sub, g2, b2, dropout_p=0.1, training=False))
    ref2 = ln_ref(x2 + sub, g2, b2)
    assert jnp.allclose(out2, ref2, atol=1e-4, rtol=1e-4), "AddNorm mismatch"

    # --- Training mode: exact check against the same host-derived mask -----
    p, seed = 0.1, 123
    out3 = jax.block_until_ready(
        add_norm_linear(x, w, b, gamma, beta, dropout_p=p, training=True, seed=seed))
    mask3 = _dropout_scale_mask(seed, p, batch * seq, input_dim,
                                x.dtype).reshape(batch, seq, input_dim)
    ref3 = ln_ref(x + (x @ w + b) * mask3, gamma, beta)
    assert jnp.allclose(out3, ref3, atol=1e-4, rtol=1e-4), "training AddNorm mismatch"
    assert bool(jnp.all(jnp.isfinite(out3)))

    print("KERNEL_OK")
</pallas_src>

<mosaic_0001>
module attributes {stable_mosaic.version = 11 : i64} {
  func.func @_addnorm_linear_kernel(%arg0: i32, %arg1: memref<8x32xf32, #tpu.memory_space<vmem>>, %arg2: memref<32x32xf32, #tpu.memory_space<vmem>>, %arg3: memref<1x32xf32, #tpu.memory_space<vmem>>, %arg4: memref<1x32xf32, #tpu.memory_space<vmem>>, %arg5: memref<1x32xf32, #tpu.memory_space<vmem>>, %arg6: memref<8x32xf32, #tpu.memory_space<vmem>>) attributes {dimension_semantics = [#tpu.dimension_semantics<parallel>], iteration_bounds = array<i64: 2>, scalar_prefetch = 0 : i64, scratch_operands = 0 : i64, tpu.core_type = #tpu.core_type<tc>, window_params = [{transform_indices = @transform_0, window_bounds = array<i64: 8, 32>}, {pipeline_mode = #tpu.pipeline_mode<synchronous>, transform_indices = @transform_1, window_bounds = array<i64: 32, 32>}, {pipeline_mode = #tpu.pipeline_mode<synchronous>, transform_indices = @transform_2, window_bounds = array<i64: 1, 32>}, {pipeline_mode = #tpu.pipeline_mode<synchronous>, transform_indices = @transform_3, window_bounds = array<i64: 1, 32>}, {pipeline_mode = #tpu.pipeline_mode<synchronous>, transform_indices = @transform_4, window_bounds = array<i64: 1, 32>}, {transform_indices = @transform_5, window_bounds = array<i64: 8, 32>}]} {
    %c0 = arith.constant 0 : index
    %c0_0 = arith.constant 0 : index
    %0 = vector.load %arg1[%c0, %c0_0] : memref<8x32xf32, #tpu.memory_space<vmem>>, vector<8x32xf32>
    %c0_1 = arith.constant 0 : index
    %c0_2 = arith.constant 0 : index
    %1 = vector.load %arg2[%c0_1, %c0_2] : memref<32x32xf32, #tpu.memory_space<vmem>>, vector<32x32xf32>
    %cst = arith.constant dense<0.000000e+00> : vector<8x32xf32>
    %2 = tpu.matmul %0, %1, %cst {dimension_numbers = #tpu.dot_dimension_numbers<[1], [0], [0], [1], [0, 0, 1, 1], [], []>} : vector<8x32xf32>, vector<32x32xf32>, vector<8x32xf32> -> vector<8x32xf32>
    %c0_3 = arith.constant 0 : index
    %c0_4 = arith.constant 0 : index
    %3 = vector.load %arg3[%c0_3, %c0_4] : memref<1x32xf32, #tpu.memory_space<vmem>>, vector<1x32xf32>
    %4 = vector.broadcast %3 : vector<1x32xf32> to vector<8x32xf32>
    %5 = arith.addf %2, %4 : vector<8x32xf32>
    %6 = arith.addf %0, %5 : vector<8x32xf32>
    %c0_5 = arith.constant 0 : index
    %c0_6 = arith.constant 0 : index
    %7 = vector.load %arg4[%c0_5, %c0_6] : memref<1x32xf32, #tpu.memory_space<vmem>>, vector<1x32xf32>
    %c0_7 = arith.constant 0 : index
    %c0_8 = arith.constant 0 : index
    %8 = vector.load %arg5[%c0_7, %c0_8] : memref<1x32xf32, #tpu.memory_space<vmem>>, vector<1x32xf32>
    %cst_9 = arith.constant dense<0.000000e+00> : vector<8xf32>
    %9 = vector.multi_reduction <add>, %6, %cst_9 [1] : vector<8x32xf32> to vector<8xf32>
    %10 = vector.shape_cast %9 : vector<8xf32> to vector<8x1xf32>
    %cst_10 = arith.constant 3.125000e-02 : f32
    %11 = vector.broadcast %cst_10 : f32 to vector<8x1xf32>
    %12 = arith.mulf %10, %11 : vector<8x1xf32>
    %13 = arith.mulf %6, %6 : vector<8x32xf32>
    %cst_11 = arith.constant dense<0.000000e+00> : vector<8xf32>
    %14 = vector.multi_reduction <add>, %13, %cst_11 [1] : vector<8x32xf32> to vector<8xf32>
    %15 = vector.shape_cast %14 : vector<8xf32> to vector<8x1xf32>
    %cst_12 = arith.constant 3.125000e-02 : f32
    %16 = vector.broadcast %cst_12 : f32 to vector<8x1xf32>
    %17 = arith.mulf %15, %16 : vector<8x1xf32>
    %18 = arith.mulf %12, %12 : vector<8x1xf32>
    %19 = arith.subf %17, %18 : vector<8x1xf32>
    %cst_13 = arith.constant 0.000000e+00 : f32
    %20 = vector.broadcast %cst_13 : f32 to vector<8x1xf32>
    %21 = arith.maximumf %19, %20 : vector<8x1xf32>
    %cst_14 = arith.constant 9.99999974E-6 : f32
    %22 = vector.broadcast %cst_14 : f32 to vector<8x1xf32>
    %23 = arith.addf %21, %22 : vector<8x1xf32>
    %24 = math.rsqrt %23 : vector<8x1xf32>
    %25 = vector.broadcast %12 : vector<8x1xf32> to vector<8x32xf32>
    %26 = arith.subf %6, %25 : vector<8x32xf32>
    %27 = vector.broadcast %24 : vector<8x1xf32> to vector<8x32xf32>
    %28 = arith.mulf %26, %27 : vector<8x32xf32>
    %29 = vector.broadcast %7 : vector<1x32xf32> to vector<8x32xf32>
    %30 = arith.mulf %28, %29 : vector<8x32xf32>
    %31 = vector.broadcast %8 : vector<1x32xf32> to vector<8x32xf32>
    %32 = arith.addf %30, %31 : vector<8x32xf32>
    %c0_15 = arith.constant 0 : index
    %c0_16 = arith.constant 0 : index
    %33 = vector.load %arg6[%c0_15, %c0_16] : memref<8x32xf32, #tpu.memory_space<vmem>>, vector<8x32xf32>
    tpu.vector_store %arg6[%c0_15, %c0_16], %32 {strides = array<i32>} : memref<8x32xf32, #tpu.memory_space<vmem>>, vector<8x32xf32>,
    return
  }
  func.func @transform_0(%arg0: i32) -> (i32, i32) {
    %c0_i32 = arith.constant 0 : i32
    %c0_i32_0 = arith.constant 0 : i32
    return %arg0, %c0_i32 : i32, i32
  }
  func.func @transform_1(%arg0: i32) -> (i32, i32) {
    %c0_i32 = arith.constant 0 : i32
    %c0_i32_0 = arith.constant 0 : i32
    %c0_i32_1 = arith.constant 0 : i32
    return %c0_i32, %c0_i32_0 : i32, i32
  }
  func.func @transform_2(%arg0: i32) -> (i32, i32) {
    %c0_i32 = arith.constant 0 : i32
    %c0_i32_0 = arith.constant 0 : i32
    %c0_i32_1 = arith.constant 0 : i32
    return %c0_i32, %c0_i32_0 : i32, i32
  }
  func.func @transform_3(%arg0: i32) -> (i32, i32) {
    %c0_i32 = arith.constant 0 : i32
    %c0_i32_0 = arith.constant 0 : i32
    %c0_i32_1 = arith.constant 0 : i32
    return %c0_i32, %c0_i32_0 : i32, i32
  }
  func.func @transform_4(%arg0: i32) -> (i32, i32) {
    %c0_i32 = arith.constant 0 : i32
    %c0_i32_0 = arith.constant 0 : i32
    %c0_i32_1 = arith.constant 0 : i32
    return %c0_i32, %c0_i32_0 : i32, i32
  }
  func.func @transform_5(%arg0: i32) -> (i32, i32) {
    %c0_i32 = arith.constant 0 : i32
    %c0_i32_0 = arith.constant 0 : i32
    return %arg0, %c0_i32 : i32, i32
  }
}

</mosaic_0001>

<llo_original>
// kernel: tpu_custom_call.1
$region0: #{tpu_custom_call.1}
  #allocation0 [shape = 'u32[]', space=smem, size = 0x4, offset = 0x4, fixed_abs, tag = 'smem constant byte address 0x4 - core index']
  #allocation1 [shape = 'u32[72,128]{1,0:T(1,128)}', space=vmem, size = 0x9000, scoped, tag = 'internal scratch']
  %s0 = inlined_call_operand.hbm [shape: f32[16,32], index: 0, kind: input, shape index: {}]
  %s1 = inlined_call_operand.hbm [shape: f32[32,32], index: 1, kind: input, shape index: {}]
  %s2 = inlined_call_operand.vmem [shape: f32[1,32], index: 2, kind: input, shape index: {}]
  %s3 = inlined_call_operand.vmem [shape: f32[1,32], index: 3, kind: input, shape index: {}]
  %s4 = inlined_call_operand.vmem [shape: f32[1,32], index: 4, kind: input, shape index: {}]
  %s5 = inlined_call_operand.hbm [shape: f32[16,32], index: 5, kind: output, shape index: {}]
  %s6 = sld [smem:[#allocation0]]
  $region61: #{tpu_custom_call.1} parent=0
    _
  %s8 = ssub.s32 1, %s6
  %s9 = scalar_select 0, %s8, %s6
  $region1: #{tpu_custom_call.1} parent=0
    #allocation2 [shape = 'u8[8192]{0}', space=vmem, size = 0x2000, scoped, tag = 'input window, operand 0']
    #allocation3 [shape = 's32[2]{0}', space=sflag, size = 0x8, scoped, tag = 'scoped memory for tpu_custom_call.1']
    #allocation4 [shape = 's32[2]{0}', space=sflag, size = 0x8, scoped, tag = 'scoped memory for tpu_custom_call.1']
    #allocation5 [shape = 'u8[16384]{0}', space=vmem, size = 0x4000, scoped, tag = 'input window, operand 1, single buffered']
    #allocation6 [shape = 's32[1]{0}', space=sflag, size = 0x4, scoped, tag = 'scoped memory for tpu_custom_call.1']
    #allocation7 [shape = 'u8[8192]{0}', space=vmem, size = 0x2000, scoped, tag = 'output window, operand 0']
    %10 = vsyncpa [#allocation3], 0
    %s11 = scalar_lea.sflag [#allocation3], 1
    %12 = vsyncpa %s11, 0
    %13 = vsyncpa [#allocation6], 0
    %14 = vsyncpa [#allocation4], 0
    %s15 = scalar_lea.sflag [#allocation4], 1
    %16 = vsyncpa %s15, 0
    loop: start=0, step=1, limit=4
    $region2: #{tpu_custom_call.1} parent=1 // loop_pre_header
      _
    $region3: #{tpu_custom_call.1} parent=1 // loop_header
      %s18 = sphi 0, %s22
      %p19 = scmp.ge.s32.totalorder %s18, 4
      %s28 = sphi 0, %s30
      %s31 = sphi 0, %s28
      %s32 = sphi 0, %s31
      %s48 = sphi 0, %s32
      %s52 = sphi 0, %s52
      %s54 = sphi 0, %s52
      %s55 = sphi 0, %s54
      %s69 = sphi 0, %s55
      %s73 = sphi 0, %s73
      %s75 = sphi 0, %s73
      %s76 = sphi 0, %s75
      %s90 = sphi 0, %s76
      %s94 = sphi 0, %s94
      %s96 = sphi 0, %s94
      %s97 = sphi 0, %s96
      %s111 = sphi 0, %s97
      %s115 = sphi 0, %s115
      %s117 = sphi 0, %s115
      %s118 = sphi 0, %s117
      %s132 = sphi 0, %s118
      %s138 = sphi 0, %s140
      %s141 = sphi 0, %s138
      %s142 = sphi 0, %s141
      %s158 = sphi 0, %s142
    $region4: #{tpu_custom_call.1} parent=1 // loop_header_branch
      %21 = sbr.rel (%p19) target = $region8
    $region5: #{tpu_custom_call.1} parent=1 // loop_body
      %s23 = ssub.s32 %s18, 1
      %s24 = ssub.s32 %s18, 2
      %s25 = sadd.s32 %s18, 1
      %s26 = ssub.s32 %s18, %s25
      %p27 = scmp.eq.s32.totalorder %s26, 0
      %s29 = sadd.s32 %s28, 1
      %s30 = scalar_select %p27, %s28, %s29
      %p33 = pneg %p27
      %p34 = scmp.eq.s32.totalorder %s18, 1
      %p35 = por %p33, %p34
      %p36 = scmp.ne.s32.totalorder %s28, %s31
      %p37 = scmp.eq.s32.totalorder %s18, 0
      %p38 = por %p36, %p37
      %p39 = scmp.ne.s32.totalorder %s28, %s31
      %p40 = scmp.eq.s32.totalorder %s23, 1
      %p41 = por %p39, %p40
      %p42 = scmp.ne.s32.totalorder %s31, %s32
      %p43 = scmp.eq.s32.totalorder %s23, 0
      %p44 = por %p42, %p43
      %p45 = scmp.ne.s32.totalorder %s31, %s32
      %p46 = scmp.eq.s32.totalorder %s24, 1
      %p47 = por %p45, %p46
      %p49 = scmp.ne.s32.totalorder %s32, %s48
      %p50 = scmp.eq.s32.totalorder %s24, 0
      %p51 = por %p49, %p50
      %s53 = sadd.s32 %s52, 1
      %p56 = scmp.eq.s32.totalorder %s18, 1
      %p57 = scmp.ne.s32.totalorder %s52, %s54
      %p58 = scmp.eq.s32.totalorder %s18, 0
      %p59 = por %p57, %p58
      %p60 = scmp.ne.s32.totalorder %s52, %s54
      %p61 = scmp.eq.s32.totalorder %s23, 1
      %p62 = por %p60, %p61
      %p63 = scmp.ne.s32.totalorder %s54, %s55
      %p64 = scmp.eq.s32.totalorder %s23, 0
      %p65 = por %p63, %p64
      %p66 = scmp.ne.s32.totalorder %s54, %s55
      %p67 = scmp.eq.s32.totalorder %s24, 1
      %p68 = por %p66, %p67
      %p70 = scmp.ne.s32.totalorder %s55, %s69
      %p71 = scmp.eq.s32.totalorder %s24, 0
      %p72 = por %p70, %p71
      %s74 = sadd.s32 %s73, 1
      %p77 = scmp.eq.s32.totalorder %s18, 1
      %p78 = scmp.ne.s32.totalorder %s73, %s75
      %p79 = scmp.eq.s32.totalorder %s18, 0
      %p80 = por %p78, %p79
      %p81 = scmp.ne.s32.totalorder %s73, %s75
      %p82 = scmp.eq.s32.totalorder %s23, 1
      %p83 = por %p81, %p82
      %p84 = scmp.ne.s32.totalorder %s75, %s76
      %p85 = scmp.eq.s32.totalorder %s23, 0
      %p86 = por %p84, %p85
      %p87 = scmp.ne.s32.totalorder %s75, %s76
      %p88 = scmp.eq.s32.totalorder %s24, 1
      %p89 = por %p87, %p88
      %p91 = scmp.ne.s32.totalorder %s76, %s90
      %p92 = scmp.eq.s32.totalorder %s24, 0
      %p93 = por %p91, %p92
      %s95 = sadd.s32 %s94, 1
      %p98 = scmp.eq.s32.totalorder %s18, 1
      %p99 = scmp.ne.s32.totalorder %s94, %s96
      %p100 = scmp.eq.s32.totalorder %s18, 0
      %p101 = por %p99, %p100
      %p102 = scmp.ne.s32.totalorder %s94, %s96
      %p103 = scmp.eq.s32.totalorder %s23, 1
      %p104 = por %p102, %p103
      %p105 = scmp.ne.s32.totalorder %s96, %s97
      %p106 = scmp.eq.s32.totalorder %s23, 0
      %p107 = por %p105, %p106
      %p108 = scmp.ne.s32.totalorder %s96, %s97
      %p109 = scmp.eq.s32.totalorder %s24, 1
      %p110 = por %p108, %p109
      %p112 = scmp.ne.s32.totalorder %s97, %s111
      %p113 = scmp.eq.s32.totalorder %s24, 0
      %p114 = por %p112, %p113
      %s116 = sadd.s32 %s115, 1
      %p119 = scmp.eq.s32.totalorder %s18, 1
      %p120 = scmp.ne.s32.totalorder %s115, %s117
      %p121 = scmp.eq.s32.totalorder %s18, 0
      %p122 = por %p120, %p121
      %p123 = scmp.ne.s32.totalorder %s115, %s117
      %p124 = scmp.eq.s32.totalorder %s23, 1
      %p125 = por %p123, %p124
      %p126 = scmp.ne.s32.totalorder %s117, %s118
      %p127 = scmp.eq.s32.totalorder %s23, 0
      %p128 = por %p126, %p127
      %p129 = scmp.ne.s32.totalorder %s117, %s118
      %p130 = scmp.eq.s32.totalorder %s24, 1
      %p131 = por %p129, %p130
      %p133 = scmp.ne.s32.totalorder %s118, %s132
      %p134 = scmp.eq.s32.totalorder %s24, 0
      %p135 = por %p133, %p134
      %s136 = ssub.s32 %s18, %s25
      %p137 = scmp.eq.s32.totalorder %s136, 0
      %s139 = sadd.s32 %s138, 1
      %s140 = scalar_select %p137, %s138, %s139
      %p143 = pneg %p137
      %p144 = scmp.eq.s32.totalorder %s18, 1
      %p145 = por %p143, %p144
      %p146 = scmp.ne.s32.totalorder %s138, %s141
      %p147 = scmp.eq.s32.totalorder %s18, 0
      %p148 = por %p146, %p147
      %p149 = scmp.ne.s32.totalorder %s138, %s141
      %p150 = scmp.eq.s32.totalorder %s23, 1
      %p151 = por %p149, %p150
      %p152 = scmp.ne.s32.totalorder %s141, %s142
      %p153 = scmp.eq.s32.totalorder %s23, 0
      %p154 = por %p152, %p153
      %p155 = scmp.ne.s32.totalorder %s141, %s142
      %p156 = scmp.eq.s32.totalorder %s24, 1
      %p157 = por %p155, %p156
      %p159 = scmp.ne.s32.totalorder %s142, %s158
      %p160 = scmp.eq.s32.totalorder %s24, 0
      %p161 = por %p159, %p160
      %p162 = scmp.le.s32.totalorder 1, %s18
      %p163 = scmp.lt.s32.totalorder %s18, 3
      %p164 = pnand %p162, %p163
      %p165 = pneg %p164
      // Predicated region
      $region9: #{tpu_custom_call.1} parent=5 // pred_check
        _
      $region10: #{tpu_custom_call.1} parent=5 // pred_check_branch
        %167 = sbr.rel (%p164) target = $region12
      $region11: #{tpu_custom_call.1} parent=5 // pred_region
        %s168 = ssub.s32 %s18, 1
        // Predicated region
        $region13: #{tpu_custom_call.1} parent=11 // pred_check
          %p169 = pneg %p65
        $region14: #{tpu_custom_call.1} parent=11 // pred_check_branch
          %171 = sbr.rel (%p169) target = $region16
        $region15: #{tpu_custom_call.1} parent=11 // pred_region
          %173 = vsyncadd [#allocation6], 0
          %s174 = sshll.u32 %s1, 4
          %s175 = int_to_ptr.hbm [resolvable:$true] %s174
          %s176 = sshll.u32 [#allocation5], 4
          %s177 = int_to_ptr.vmem [resolvable:$true] %s176
          %182 = dma.hbm_to_vmem [thread:$0]  %s175, 512, %s177, [#allocation6], 128, 128, 8
        $region16: #{tpu_custom_call.1} parent=11 // pred_fallthru
          _
        // Predicated region
        $region17: #{tpu_custom_call.1} parent=11 // pred_check
          %p183 = pneg %p86
        $region18: #{tpu_custom_call.1} parent=11 // pred_check_branch
          %185 = sbr.rel (%p183) target = $region20
        $region19: #{tpu_custom_call.1} parent=11 // pred_region
          _
        $region20: #{tpu_custom_call.1} parent=11 // pred_fallthru
          _
        // Predicated region
        $region21: #{tpu_custom_call.1} parent=11 // pred_check
          %p186 = pneg %p107
        $region22: #{tpu_custom_call.1} parent=11 // pred_check_branch
          %188 = sbr.rel (%p186) target = $region24
        $region23: #{tpu_custom_call.1} parent=11 // pred_region
          _
        $region24: #{tpu_custom_call.1} parent=11 // pred_fallthru
          _
        // Predicated region
        $region25: #{tpu_custom_call.1} parent=11 // pred_check
          %p189 = pneg %p128
        $region26: #{tpu_custom_call.1} parent=11 // pred_check_branch
          %191 = sbr.rel (%p189) target = $region28
        $region27: #{tpu_custom_call.1} parent=11 // pred_region
          _
        $region28: #{tpu_custom_call.1} parent=11 // pred_fallthru
          _
      $region12: #{tpu_custom_call.1} parent=5 // pred_fallthru
        _
      %p192 = scmp.lt.s32.totalorder %s18, 2
      // Predicated region
      $region29: #{tpu_custom_call.1} parent=5 // pred_check
        %p193 = pneg %p192
      $region30: #{tpu_custom_call.1} parent=5 // pred_check_branch
        %195 = sbr.rel (%p193) target = $region32
      $region31: #{tpu_custom_call.1} parent=5 // pred_region
        // Predicated region
        $region33: #{tpu_custom_call.1} parent=31 // pred_check
          %p196 = pneg %p38
        $region34: #{tpu_custom_call.1} parent=31 // pred_check_branch
          %198 = sbr.rel (%p196) target = $region36
        $region35: #{tpu_custom_call.1} parent=31 // pred_region
          %s199 = sand.u32 %s28, 1
          %s200 = scalar_lea.sflag [#allocation3], %s199
          %s201 = sand.u32 %s28, 1
          %s202 = smul.addr %s201, 8
          %s203 = scalar_lea.vmem [#allocation2], %s202
          %205 = vsyncadd %s200, 0
          %s206 = smul.addr %s18, 8
          %s207 = scalar_lea.hbm %s0, %s206
          %s209 = sshll.u32 %s207, 4
          %s210 = int_to_ptr.hbm [resolvable:$true] %s209
          %s211 = sshll.u32 %s203, 4
          %s212 = int_to_ptr.vmem [resolvable:$true] %s211
          %214 = dma.hbm_to_vmem [thread:$0]  %s210, 128, %s212, %s200
        $region36: #{tpu_custom_call.1} parent=31 // pred_fallthru
          _
      $region32: #{tpu_custom_call.1} parent=5 // pred_fallthru
        _
      %p215 = scmp.le.s32.totalorder 1, %s18
      %p216 = scmp.lt.s32.totalorder %s18, 3
      %p217 = pnand %p215, %p216
      %p218 = pneg %p217
      // Predicated region
      $region37: #{tpu_custom_call.1} parent=5 // pred_check
        _
      $region38: #{tpu_custom_call.1} parent=5 // pred_check_branch
        %220 = sbr.rel (%p217) target = $region40
      $region39: #{tpu_custom_call.1} parent=5 // pred_region
        %s221 = ssub.s32 %s18, 1
        %s222 = sand.u32 %s31, 1
        %s223 = scalar_lea.sflag [#allocation3], %s222
        %s224 = sand.u32 %s31, 1
        %s225 = smul.addr %s224, 8
        %s226 = scalar_lea.vmem [#allocation2], %s225
        // Predicated region
        $region41: #{tpu_custom_call.1} parent=39 // pred_check
          %p227 = pneg %p44
        $region42: #{tpu_custom_call.1} parent=39 // pred_check_branch
          %229 = sbr.rel (%p227) target = $region44
        $region43: #{tpu_custom_call.1} parent=39 // pred_region
          %231 = dma.done %s223, 128
        $region44: #{tpu_custom_call.1} parent=39 // pred_fallthru
          _
        // Predicated region
        $region45: #{tpu_custom_call.1} parent=39 // pred_check
          %p232 = pneg %p65
        $region46: #{tpu_custom_call.1} parent=39 // pred_check_branch
          %234 = sbr.rel (%p232) target = $region48
        $region47: #{tpu_custom_call.1} parent=39 // pred_region
          %236 = dma.done [#allocation6], 512
        $region48: #{tpu_custom_call.1} parent=39 // pred_fallthru
          _
        %s237 = sand.u32 %s31, 1
        %s238 = scalar_lea.sflag [#allocation3], %s237
        %s239 = sand.u32 %s31, 1
        %s240 = smul.addr %s239, 8
        %s241 = scalar_lea.vmem [#allocation2], %s240
        %p242 = pneg %p44
        %p243 = pneg %p41
        %p244 = pneg %p65
        %p245 = pneg %p62
        %p246 = pneg %p86
        %p247 = pneg %p83
        %p248 = pneg %p107
        %p249 = pneg %p104
        %p250 = pneg %p128
        %p251 = pneg %p125
        %p252 = pneg %p154
        %p253 = pneg %p151
        %s254 = sand.u32 %s141, 1
        %s255 = scalar_lea.sflag [#allocation4], %s254
        %s256 = sand.u32 %s141, 1
        %s257 = smul.addr %s256, 8
        %s258 = scalar_lea.vmem [#allocation7], %s257
        %v259 = vld [vmem:[%s226] sm:$0xff]
        %v260 = vld [vmem:[#allocation5] sm:$0xff]
        %v261 = vld [vmem:[#allocation5 + $0x8] sm:$0xff]
        %v262 = vld [vmem:[#allocation5 + $0x10] sm:$0xff]
        %v263 = vld [vmem:[#allocation5 + $0x18] sm:$0xff]
        %v264 = vld [vmem:[%s2] sm:$0x1]
        %v266 = vperm.slane %v264, 0
        %vm268 = vcmask 261120
        %v270 = vsel %vm268, %v259, 0
        %272 = vmatpush.msra.mxu0 0.0
        %273 = vmatpush.msra.mxu0 0.0
        %274 = vmatpush.msra.mxu0 0.0
        %275 = vmatpush.msra.mxu0 0.0
        %276 = vmatpush.msra.mxu0 0.0
        %277 = vmatpush.msra.mxu0 0.0
        %278 = vmatpush.msra.mxu0 0.0
        %279 = vmatpush.msra.mxu0 0.0
        %280 = vmatpush.msra.mxu0 0.0
        %281 = vmatpush.msra.mxu0 0.0
        %282 = vmatpush.msra.mxu0 0.0
        %283 = vmatpush.msra.mxu0 0.0
        %284 = vmatpush.msra.mxu0 %v263
        %285 = vmatpush.msra.mxu0 %v262
        %286 = vmatpush.msra.mxu0 %v261
        %287 = vmatpush.msra.mxu0 %v260
        %288 = vmatmul.f32.gmra.mxu0 %v270
        %v289 = vpop.f32.mrf.mxu0
        %v290 = vadd.f32 %v266, %v289
        %291 = vdwg.mxu0
        %v292 = vadd.f32 %v259, %v290
        %v293 = vld [vmem:[%s3] sm:$0x1]
        %v294 = vld [vmem:[%s4] sm:$0x1]
        %v295 = vsel %vm268, %v292, 0.0
        %296 = vadd.xlane.f32.xlu0 %v295
        %v297 = vpop.xlane.xlu0 %296
        %v298 = vmul.f32 %v297, 0.03125
        %v299 = vmul.f32 %v292, %v292
        %v300 = vsel %vm268, %v299, 0.0
        %301 = vadd.xlane.f32.xlu0 %v300
        %v302 = vpop.xlane.xlu0 %301
        %v303 = vmul.f32 %v302, 0.03125
        %v304 = vmul.f32 %v298, %v298
        %v305 = vsub.f32 %v303, %v304
        %v306 = vmax.f32 %v305, 0.0
        %v307 = vadd.f32 %v306, 1e-05
        %v308 = vrsqrt.pop %v307
        %v309 = vmul.f32 %v308, %v307
        %v310 = vmul.f32 %v309, %v308
        %v311 = vmul.f32 0.5, %v310
        %v312 = vsub.f32 1.5, %v311
        %v313 = vmul.f32 %v308, %v312
        %vm314 = vweird.f32 %v307
        %vm315 = vweird.f32 %v308
        %vm316 = vmor %vm314, %vm315
        %v317 = vsel %vm316, %v308, %v313
        %v318 = vsub.f32 %v292, %v298
        %v319 = vmul.f32 %v318, %v317
        %v321 = vperm.slane %v293, 0
        %v323 = vmul.f32 %v319, %v321
        %v325 = vperm.slane %v294, 0
        %v327 = vadd.f32 %v323, %v325
        %328 = vst.msk [vmem:[%s258] sm:$0xff] %vm268, %v327
        %s329 = sand.u32 %s141, 1
        %s330 = scalar_lea.sflag [#allocation4], %s329
        %s331 = sand.u32 %s141, 1
        %s332 = smul.addr %s331, 8
        %s333 = scalar_lea.vmem [#allocation7], %s332
        // Predicated region
        $region49: #{tpu_custom_call.1} parent=39 // pred_check
          %p334 = pneg %p151
        $region50: #{tpu_custom_call.1} parent=39 // pred_check_branch
          %336 = sbr.rel (%p334) target = $region52
        $region51: #{tpu_custom_call.1} parent=39 // pred_region
          %338 = vsyncadd %s330, 0
          %s339 = smul.addr %s23, 8
          %s340 = scalar_lea.hbm %s5, %s339
          %s342 = sshll.u32 %s333, 4
          %s343 = int_to_ptr.vmem [resolvable:$true] %s342
          %s344 = sshll.u32 %s340, 4
          %s345 = int_to_ptr.hbm [resolvable:$true] %s344
          %347 = dma.vmem_to_hbm [thread:$0]  %s343, 128, %s345, %s330
        $region52: #{tpu_custom_call.1} parent=39 // pred_fallthru
          _
      $region40: #{tpu_custom_call.1} parent=5 // pred_fallthru
        _
      %p348 = scmp.le.s32.totalorder 2, %s18
      // Predicated region
      $region53: #{tpu_custom_call.1} parent=5 // pred_check
        %p349 = pneg %p348
      $region54: #{tpu_custom_call.1} parent=5 // pred_check_branch
        %351 = sbr.rel (%p349) target = $region56
      $region55: #{tpu_custom_call.1} parent=5 // pred_region
        %s352 = ssub.s32 %s18, 2
        // Predicated region
        $region57: #{tpu_custom_call.1} parent=55 // pred_check
          %p353 = pneg %p157
        $region58: #{tpu_custom_call.1} parent=55 // pred_check_branch
          %355 = sbr.rel (%p353) target = $region60
        $region59: #{tpu_custom_call.1} parent=55 // pred_region
          %s356 = sand.u32 %s142, 1
          %s357 = scalar_lea.sflag [#allocation4], %s356
          %s358 = sand.u32 %s142, 1
          %s359 = smul.addr %s358, 8
          %s360 = scalar_lea.vmem [#allocation7], %s359
          %362 = dma.done %s357, 128
        $region60: #{tpu_custom_call.1} parent=55 // pred_fallthru
          _
      $region56: #{tpu_custom_call.1} parent=5 // pred_fallthru
        _
    $region6: #{tpu_custom_call.1} parent=1 // loop_footer
      %s22 = sadd.s32 1, %s18
    $region7: #{tpu_custom_call.1} parent=1 // loop_footer_branch
      %17 = sbr.rel target = $region3
    $region8: #{tpu_custom_call.1} parent=1 // loop_exit
      _
    %363 = vsyncpa [#allocation3], 1
    %s364 = scalar_lea.sflag [#allocation3], 1
    %365 = vsyncpa %s364, 1
    %366 = vsyncpa [#allocation6], 1
    %367 = vsyncpa [#allocation4], 1
    %s368 = scalar_lea.sflag [#allocation4], 1
    %369 = vsyncpa %s368, 1

</llo_original>
